<compile_context>
chip_gen: v7x
topology: tpu7x:2x2x1
jax: 0.10.0
libtpu: 0.0.40
codegen_flags: <defaults>
</compile_context>

<pallas_src>
import functools
import math

import jax
import jax.numpy as jnp
from jax.experimental import pallas as pl
from jax.experimental.pallas import tpu as pltpu


LANES = 512            # lane-dense last dim (large multiple of 128 -> unmasked vst)
MAX_TILE_ROWS = 2048   # rows per grid step; f32 block = 4 MiB, double-buffered in+out = 16 MiB


def _softplus_transformed_kernel(x_ref, o_ref, *, beta, bias, threshold):
    # Load in the I/O dtype, compute in f32 (EUP-friendly, numerically safe).
    x = x_ref[...].astype(jnp.float32)
    bx = x * beta
    # Clamp the exp argument; the > threshold branch uses x directly anyway, and this also
    # keeps any garbage in a clamped trailing partial block finite.
    sp = jnp.log1p(jnp.exp(jnp.minimum(bx, threshold))) * (1.0 / beta)
    out = jnp.where(bx > threshold, x, sp) + bias
    o_ref[...] = out.astype(o_ref.dtype)


def softplus_transformed(x, intercept_ordinate=0.6931, bias=0.0, threshold=20.0):
    """Forward pass of SoftPlusTransformed. Works for any input shape; float dtypes kept as-is."""
    assert intercept_ordinate > bias, (
        "The ordinate intercept is not allowed to be smaller than or equal to the bias!")
    beta = math.log(2.0) / (intercept_ordinate - bias)

    orig_shape = x.shape
    if not jnp.issubdtype(x.dtype, jnp.floating):
        x = x.astype(jnp.float32)          # torch softplus is float-only; promote ints
    dtype = x.dtype

    n = int(x.size)
    if n == 0:
        return jnp.reshape(x, orig_shape)

    flat = jnp.ravel(x)                    # free for contiguous inputs (no cast, no copy)
    rows = pl.cdiv(n, LANES)
    padded = rows * LANES
    ragged = padded != n
    if ragged:
        # TODO(synk): handle the ragged tail in-kernel (iota mask on the last block) to avoid
        # this extra pad + slice HBM pass; only hit when x.size % 512 != 0.
        flat = jnp.pad(flat, (0, padded - n))
    x2d = flat.reshape(rows, LANES)

    # Sublane multiple for the block's second-to-last dim: 8 (f32), 16 (bf16/fp16), 32 (8-bit).
    itemsize = jnp.dtype(dtype).itemsize
    sublane_mult = 8 * max(1, 4 // itemsize)

    if rows <= 2 * sublane_mult:
        tile_rows = rows                                   # single block == full dim (valid)
    else:
        # Ensure >= 2 grid steps so both TensorCores (v7x megacore) get work, capped by
        # MAX_TILE_ROWS, rounded down to the sublane multiple.
        target = min(MAX_TILE_ROWS, pl.cdiv(rows, 2))
        tile_rows = max(sublane_mult, (target // sublane_mult) * sublane_mult)

    grid = (pl.cdiv(rows, tile_rows),)     # Pallas clamps the trailing partial block

    out2d = pl.pallas_call(
        functools.partial(_softplus_transformed_kernel,
                          beta=beta, bias=bias, threshold=threshold),
        out_shape=jax.ShapeDtypeStruct((rows, LANES), dtype),
        grid=grid,
        in_specs=[pl.BlockSpec((tile_rows, LANES), lambda i: (i, 0))],
        out_specs=pl.BlockSpec((tile_rows, LANES), lambda i: (i, 0)),
        compiler_params=pltpu.CompilerParams(
            dimension_semantics=("parallel",),
            vmem_limit_bytes=32 * 1024 * 1024),
    )(x2d)

    if ragged:
        return out2d.reshape(-1)[:n].reshape(orig_shape)
    return out2d.reshape(orig_shape)


def _reference(x, intercept_ordinate=0.6931, bias=0.0, threshold=20.0):
    """Pure-jnp reference mirroring torch.nn.Softplus(beta, threshold) + bias."""
    beta = math.log(2.0) / (intercept_ordinate - bias)
    xf = x.astype(jnp.float32)
    bx = beta * xf
    sp = jnp.where(bx > threshold, xf,
                   jnp.log1p(jnp.exp(jnp.minimum(bx, threshold))) / beta)
    return (sp + bias).astype(x.dtype)


if __name__ == "__main__":
    key = jax.random.PRNGKey(0)

    # Small example consistent with an elementwise activation module.
    x = 10.0 * jax.random.normal(key, (2, 4, 16, 16), dtype=jnp.float32)

    # Default parameters (intercept_ordinate=0.6931, bias=0.0, threshold=20).
    out = softplus_transformed(x)
    out = jax.block_until_ready(out)
    assert out.shape == x.shape and out.dtype == x.dtype, (out.shape, out.dtype)
    ref = _reference(x)
    assert jnp.allclose(out, ref, atol=1e-5, rtol=1e-5), float(jnp.max(jnp.abs(out - ref)))

    # Non-default parameters (exercises the bias / beta path).
    out2 = softplus_transformed(x, intercept_ordinate=1.5, bias=0.5, threshold=20.0)
    out2 = jax.block_until_ready(out2)
    ref2 = _reference(x, intercept_ordinate=1.5, bias=0.5, threshold=20.0)
    assert jnp.allclose(out2, ref2, atol=1e-5, rtol=1e-5), float(jnp.max(jnp.abs(out2 - ref2)))

    print("KERNEL_OK")
</pallas_src>

<mosaic_0001>
module attributes {stable_mosaic.version = 11 : i64} {
  func.func @_softplus_transformed_kernel(%arg0: i32, %arg1: memref<4x512xf32, #tpu.memory_space<vmem>>, %arg2: memref<4x512xf32, #tpu.memory_space<vmem>>) attributes {dimension_semantics = [#tpu.dimension_semantics<parallel>], iteration_bounds = array<i64: 1>, scalar_prefetch = 0 : i64, scratch_operands = 0 : i64, tpu.core_type = #tpu.core_type<tc>, window_params = [{transform_indices = @transform_0, window_bounds = array<i64: 4, 512>}, {transform_indices = @transform_1, window_bounds = array<i64: 4, 512>}]} {
    %c0 = arith.constant 0 : index
    %c0_0 = arith.constant 0 : index
    %0 = vector.load %arg1[%c0, %c0_0] : memref<4x512xf32, #tpu.memory_space<vmem>>, vector<4x512xf32>
    %cst = arith.constant 1.00006807 : f32
    %1 = vector.broadcast %cst : f32 to vector<4x512xf32>
    %2 = arith.mulf %0, %1 : vector<4x512xf32>
    %cst_1 = arith.constant 2.000000e+01 : f32
    %3 = vector.broadcast %cst_1 : f32 to vector<4x512xf32>
    %4 = arith.minimumf %2, %3 : vector<4x512xf32>
    %5 = math.exp %4 : vector<4x512xf32>
    %6 = math.log1p %5 : vector<4x512xf32>
    %cst_2 = arith.constant 0.999931931 : f32
    %7 = vector.broadcast %cst_2 : f32 to vector<4x512xf32>
    %8 = arith.mulf %6, %7 : vector<4x512xf32>
    %cst_3 = arith.constant 2.000000e+01 : f32
    %9 = vector.broadcast %cst_3 : f32 to vector<4x512xf32>
    %10 = arith.cmpf ogt, %2, %9 : vector<4x512xf32>
    %11 = arith.select %10, %0, %8 : vector<4x512xi1>, vector<4x512xf32>
    %cst_4 = arith.constant 0.000000e+00 : f32
    %12 = vector.broadcast %cst_4 : f32 to vector<4x512xf32>
    %13 = arith.addf %11, %12 : vector<4x512xf32>
    %c0_5 = arith.constant 0 : index
    %c0_6 = arith.constant 0 : index
    %14 = vector.load %arg2[%c0_5, %c0_6] : memref<4x512xf32, #tpu.memory_space<vmem>>, vector<4x512xf32>
    tpu.vector_store %arg2[%c0_5, %c0_6], %13 {strides = array<i32>} : memref<4x512xf32, #tpu.memory_space<vmem>>, vector<4x512xf32>,
    return
  }
  func.func @transform_0(%arg0: i32) -> (i32, i32) {
    %c0_i32 = arith.constant 0 : i32
    %c0_i32_0 = arith.constant 0 : i32
    return %arg0, %c0_i32 : i32, i32
  }
  func.func @transform_1(%arg0: i32) -> (i32, i32) {
    %c0_i32 = arith.constant 0 : i32
    %c0_i32_0 = arith.constant 0 : i32
    return %arg0, %c0_i32 : i32, i32
  }
}

</mosaic_0001>

<llo_original>
// kernel: tpu_custom_call.1
$region0: #{tpu_custom_call.1}
  #allocation0 [shape = 'u32[]', space=smem, size = 0x4, offset = 0x4, fixed_abs, tag = 'smem constant byte address 0x4 - core index']
  #allocation1 [shape = 'u32[144,128]{1,0:T(1,128)}', space=vmem, size = 0x12000, scoped, tag = 'internal scratch']
  %s0 = inlined_call_operand.hbm [shape: f32[4,512], index: 0, kind: input, shape index: {}]
  %s1 = inlined_call_operand.hbm [shape: f32[4,512], index: 1, kind: output, shape index: {}]
  %s2 = sld [smem:[#allocation0]]
  $region18: #{tpu_custom_call.1} parent=0
    _
  %s4 = ssub.s32 1, %s2
  %s5 = scalar_select 0, %s4, %s2
  $region1: #{tpu_custom_call.1} parent=0
    #allocation2 [shape = 'u8[8192]{0}', space=vmem, size = 0x2000, scoped, tag = 'input window, operand 0, single buffered']
    #allocation3 [shape = 's32[1]{0}', space=sflag, size = 0x4, scoped, tag = 'scoped memory for tpu_custom_call.1']
    #allocation4 [shape = 's32[1]{0}', space=sflag, size = 0x4, scoped, tag = 'scoped memory for tpu_custom_call.1']
    #allocation5 [shape = 'u8[8192]{0}', space=vmem, size = 0x2000, scoped, tag = 'output window, operand 0, single buffered']
    %6 = vsyncpa [#allocation3], 0
    %7 = vsyncpa [#allocation4], 0
    // Predicated region
    $region2: #{tpu_custom_call.1} parent=1 // pred_check
      _
    $region3: #{tpu_custom_call.1} parent=1 // pred_check_branch
      %9 = sbr.rel (0) target = $region5
    $region4: #{tpu_custom_call.1} parent=1 // pred_region
      %s11 = ssub.s32 256, 256
      %12 = vsyncadd [#allocation3], %s11
      %s14 = sshll.u32 [#allocation2], 4
      %s15 = int_to_ptr.vmem [resolvable:$true] %s14
      %17 = dma.hbm_to_vmem [thread:$0]  %s0, 256, %s15, [#allocation3]
    $region5: #{tpu_custom_call.1} parent=1 // pred_fallthru
      _
    // Predicated region
    $region6: #{tpu_custom_call.1} parent=1 // pred_check
      _
    $region7: #{tpu_custom_call.1} parent=1 // pred_check_branch
      %19 = sbr.rel (0) target = $region9
    $region8: #{tpu_custom_call.1} parent=1 // pred_region
      %20 = dma.done [#allocation3], 256
    $region9: #{tpu_custom_call.1} parent=1 // pred_fallthru
      _
    %v21 = vld [vmem:[#allocation2] sm:$0xff]
    %v22 = vld [vmem:[#allocation2 + $0x8] sm:$0xff]
    %v23 = vmul.f32 %v21, 1.0000681
    %v24 = vmul.f32 %v22, 1.0000681
    %v25 = vmin.f32 %v23, 20.0
    %v26 = vmin.f32 %v24, 20.0
    %v27 = vmul.f32 %v25, 1.442695
    %v28 = vpow.pop %v27
    %v29 = vmul.f32 %v26, 1.442695
    %v30 = vpow.pop %v29
    %v31 = vadd.f32 %v28, 1.0
    %v32 = vlog2.pop %v31
    %v33 = vmul.f32 %v32, 0.6931472
    %v34 = vmul.f32 -0.5, %v28
    %v35 = vadd.f32 %v34, 1.0
    %v36 = vmul.f32 %v35, %v28
    %v37 = vand.u32 2147483647, %v28
    %vm38 = vcmp.lt.f32.partialorder %v37, 0.0004427343
    %v39 = vsel %vm38, %v36, %v33
    %v40 = vadd.f32 %v30, 1.0
    %v41 = vlog2.pop %v40
    %v42 = vmul.f32 %v41, 0.6931472
    %v43 = vmul.f32 -0.5, %v30
    %v44 = vadd.f32 %v43, 1.0
    %v45 = vmul.f32 %v44, %v30
    %v46 = vand.u32 2147483647, %v30
    %vm47 = vcmp.lt.f32.partialorder %v46, 0.0004427343
    %v48 = vsel %vm47, %v45, %v42
    %v49 = vmul.f32 %v39, 0.99993193
    %v50 = vmul.f32 %v48, 0.99993193
    %vm51 = vcmp.gt.f32.partialorder %v23, 20.0
    %vm52 = vcmp.gt.f32.partialorder %v24, 20.0
    %v53 = vsel %vm51, %v21, %v49
    %v54 = vsel %vm52, %v22, %v50
    %v55 = vadd.f32 %v53, 0.0
    %v56 = vadd.f32 %v54, 0.0
    %57 = vst [vmem:[#allocation5] sm:$0xff] %v55
    %58 = vst [vmem:[#allocation5 + $0x8] sm:$0xff] %v56
    // Predicated region
    $region10: #{tpu_custom_call.1} parent=1 // pred_check
      _
    $region11: #{tpu_custom_call.1} parent=1 // pred_check_branch
      %60 = sbr.rel (0) target = $region13
    $region12: #{tpu_custom_call.1} parent=1 // pred_region
      %s62 = ssub.s32 256, 256
      %63 = vsyncadd [#allocation4], %s62
      %s65 = sshll.u32 [#allocation5], 4
      %s66 = int_to_ptr.vmem [resolvable:$true] %s65
      %68 = dma.vmem_to_hbm [thread:$0]  %s66, 256, %s1, [#allocation4]
    $region13: #{tpu_custom_call.1} parent=1 // pred_fallthru
      _
    // Predicated region
    $region14: #{tpu_custom_call.1} parent=1 // pred_check
      _
    $region15: #{tpu_custom_call.1} parent=1 // pred_check_branch
      %70 = sbr.rel (0) target = $region17
    $region16: #{tpu_custom_call.1} parent=1 // pred_region
      %71 = dma.done [#allocation4], 256
    $region17: #{tpu_custom_call.1} parent=1 // pred_fallthru
      _
    %72 = vsyncpa [#allocation3], 1
    %73 = vsyncpa [#allocation4], 1

</llo_original>
